<compile_context>
chip_gen: v6e
topology: v6e:2x2x1
jax: 0.10.0
libtpu: 0.0.40
codegen_flags: <defaults>
</compile_context>

<pallas_src>
import functools

import numpy as np
import jax
import jax.numpy as jnp
from jax import lax
from jax.experimental import pallas as pl
from jax.experimental.pallas import tpu as pltpu


_VMEM_LIMIT_BYTES = 48 << 20   # explicit scoped-VMEM limit (v5e default 16 MiB is too small,
                               # v7x physical VMEM is 64 MiB -> 48 MiB leaves headroom)
_TILE_BYTE_BUDGET = 24 << 20   # double-buffered tile bytes per pallas_call
_ROW_CAP = 512                 # ~85% of HBM roofline measured at 512-row tiles


def _round_down(x, m):
    return (x // m) * m


def _row_tile(n_rows, bytes_per_row, align, *, cap=_ROW_CAP,
              budget=_TILE_BYTE_BUDGET, prefer_multi=False):
    """Byte-budgeted row tile: a multiple of `align`, or the full extent.

    `prefer_multi` caps the tile below the full extent so the 'parallel' grid
    axis has >=2 steps (keeps both v7x TensorCores busy; harmless on v5e/v6e).
    """
    t = _round_down(max(align, min(cap, budget // max(1, bytes_per_row))), align)
    t = max(t, align)
    if t >= n_rows:
        if prefer_multi and n_rows > align:
            sub = _round_down(n_rows - 1, align)   # largest multiple of align < n_rows
            if sub >= align:
                return sub
        return n_rows
    return t


# ----------------------------- fill_feats kernel -----------------------------

def _feat_kernel(org_ref, gen_ref, out_ref, *, split):
    # fill_feats = cat(org_feats, gen_feats.view(...,P,F).flatten(2,3)), dim=-2
    # done lane-dense on flattened (node*feat) lanes:
    #   out[:, :n0*F] = org_flat ; out[:, n0*F:] = gen_flat
    # TODO(synk): if split % 128 != 0 the second store becomes a lane-shifted
    # masked store; for such shapes prefer plain jnp.concatenate (pure copy).
    out_ref[:, :split] = org_ref[...]
    out_ref[:, split:] = gen_ref[...]


# ----------------------------- adjacency kernel ------------------------------

def _adj_kernel(col_tgt_ref, row_tgt_ref, base_ref, out_ref, *, tile_r):
    # base_ref   : (TILE_R, N) int8 -- org-edge adjacency (no eye; self-loops here).
    # col_tgt_ref: (1, N) int32     -- parent row of column c if that generated
    #                                  node is active (slot < clamped degree), else -1.
    # row_tgt_ref: (TILE_R, 1) int32-- parent column of row r if active, else -1.
    n = base_ref.shape[1]
    r0 = pl.program_id(0) * tile_r
    row = lax.broadcasted_iota(jnp.int32, (tile_r, 1), 0) + r0
    col = lax.broadcasted_iota(jnp.int32, (1, n), 1)

    # org edges OR mended edges (symmetric) OR self-loop, all as boolean compares
    # (nx.Graph dedupes duplicate edges, so OR == max on the {0,1} adjacency).
    edge = ((base_ref[...] != 0)
            | (col_tgt_ref[...] == row)
            | (row_tgt_ref[...] == col)
            | (row == col))
    a = edge.astype(jnp.float32)

    rowsum = jnp.sum(a, axis=1, keepdims=True)
    # Exact reciprocal (keeps 1e-6 tolerance). Valid rows always have rowsum >= 1
    # (self loop); the max() only guards garbage rows of a padded partial block.
    out_ref[...] = a * (1.0 / jnp.maximum(rowsum, 1.0))


class MendGraph:
    def __init__(self, node_len, num_pred, feat_shape):
        self.num_pred = num_pred
        self.feat_shape = feat_shape
        self.org_node_len = node_len
        self.node_len = node_len + node_len * num_pred

    def __call__(self, org_feats, org_edges, pred_missing, gen_feats):
        n0, p, f = self.org_node_len, self.num_pred, self.feat_shape
        n = self.node_len
        b0, b1 = org_feats.shape[0], org_feats.shape[1]
        b = b0 * b1
        assert gen_feats.dtype == org_feats.dtype, "org/gen feature dtypes must match"

        # ---- fill_feats: lane-dense concat along the node axis ----
        dsize = jnp.dtype(org_feats.dtype).itemsize
        org2 = org_feats.reshape(b, n0 * f)
        gen2 = gen_feats.reshape(b, n0 * p * f)   # view(...,P,F).flatten(2,3), flattened
        feat_align = 8 * max(1, 4 // dsize)                  # sublane packing for the dtype
        feat_row_bytes = 2 * (2 * n * f * dsize)             # (in + out) x double-buffer
        tile_b = _row_tile(b, feat_row_bytes, feat_align)
        split = n0 * f
        fill2 = pl.pallas_call(
            functools.partial(_feat_kernel, split=split),
            out_shape=jax.ShapeDtypeStruct((b, n * f), org_feats.dtype),
            grid=(pl.cdiv(b, tile_b),),
            in_specs=[pl.BlockSpec((tile_b, n0 * f), lambda i: (i, 0)),
                      pl.BlockSpec((tile_b, n0 * p * f), lambda i: (i, 0))],
            out_specs=pl.BlockSpec((tile_b, n * f), lambda i: (i, 0)),
            compiler_params=pltpu.CompilerParams(
                dimension_semantics=("parallel",),
                vmem_limit_bytes=_VMEM_LIMIT_BYTES),
        )(org2, gen2)
        fill_feats = fill2.reshape(b0, b1, n, f)

        # ---- adjacency ----
        # torch._cast_Int truncates toward zero; then min(num_pred, max(0, deg)).
        deg_c = jnp.clip(pred_missing.astype(jnp.int32), 0, p)

        # Precompute parent-target vectors (replaces in-kernel //, % and 2D iota math):
        # generated node t = n0 + i*p + j is "active" iff j < deg_c[i]; its target is i.
        idx = jnp.arange(n, dtype=jnp.int32)
        parent = (idx - n0) // p
        slot = (idx - n0) % p
        active = (idx >= n0) & (slot < deg_c[jnp.clip(parent, 0, n0 - 1)])
        tgt = jnp.where(active, parent, -1).astype(jnp.int32)
        col_tgt = tgt.reshape(1, n)   # lane-dense, per-column target (or -1)
        row_tgt = tgt.reshape(n, 1)   # per-row target (or -1)

        # TODO(synk): the arbitrary org_edges scatter (networkx graph build) has no
        # clean Pallas equivalent; one merged XLA dense scatter builds the int8 org
        # adjacency (self-loops and mended edges are generated inside the kernel).
        e = jnp.concatenate([org_edges, org_edges[:, ::-1]], axis=0)
        base = jnp.zeros((n, n), jnp.int8).at[e[:, 0], e[:, 1]].set(jnp.int8(1))

        adj_row_bytes = 2 * (1 + 4) * n + 8       # int8 in + f32 out, double-buffered
        # align=32: int8 sublane packing (4x) -- safe sub-tile granularity for the base.
        tile_r = _row_tile(n, adj_row_bytes, 32, prefer_multi=True)
        adj = pl.pallas_call(
            functools.partial(_adj_kernel, tile_r=tile_r),
            out_shape=jax.ShapeDtypeStruct((n, n), jnp.float32),
            grid=(pl.cdiv(n, tile_r),),
            in_specs=[pl.BlockSpec((1, n), lambda i: (0, 0)),        # col targets
                      pl.BlockSpec((tile_r, 1), lambda i: (i, 0)),   # row targets
                      pl.BlockSpec((tile_r, n), lambda i: (i, 0))],  # int8 org adjacency
            out_specs=pl.BlockSpec((tile_r, n), lambda i: (i, 0)),
            compiler_params=pltpu.CompilerParams(
                dimension_semantics=("parallel",),
                vmem_limit_bytes=_VMEM_LIMIT_BYTES),
        )(col_tgt, row_tgt, base)

        return fill_feats, adj


if __name__ == "__main__":
    N0, P, F = 8, 4, 16          # org_node_len, num_pred, feat_shape
    B0, B1 = 2, 1
    key = jax.random.PRNGKey(0)
    k1, k2, k3 = jax.random.split(key, 3)

    org_feats = jax.random.normal(k1, (B0, B1, N0, F), jnp.float32)
    gen_feats = jax.random.normal(k2, (B0, B1, N0, P * F), jnp.float32)
    pred_missing = jax.random.uniform(k3, (N0,), jnp.float32, minval=-1.0, maxval=P + 2.0)
    org_edges = jnp.array([[i, (i + 1) % N0] for i in range(N0)], jnp.int32)  # ring graph

    model = MendGraph(N0, P, F)
    fill_feats, adj = model(org_feats, org_edges, pred_missing, gen_feats)
    jax.block_until_ready((fill_feats, adj))

    # ---- reference (numpy, mirrors the PyTorch semantics) ----
    np_org = np.asarray(org_feats)
    np_gen = np.asarray(gen_feats).reshape(B0, B1, N0, P, F).reshape(B0, B1, N0 * P, F)
    ref_feats = np.concatenate([np_org, np_gen], axis=-2)

    deg = np.asarray(pred_missing).astype(np.int32)   # trunc toward zero == _cast_Int
    N = N0 * (1 + P)
    A = np.zeros((N, N), np.float32)
    for (u, v) in np.asarray(org_edges):
        A[u, v] = 1.0
        A[v, u] = 1.0
    for i in range(N0):
        for j in range(min(P, max(0, int(deg[i])))):
            t = N0 + i * P + j
            A[i, t] = 1.0
            A[t, i] = 1.0
    A = A + np.eye(N, dtype=np.float32)
    rs = A.sum(1)
    rinv = np.where(rs == 0, 0.0, 1.0 / rs)
    ref_adj = A * rinv[:, None]

    assert fill_feats.shape == (B0, B1, N, F)
    assert adj.shape == (N, N)
    assert np.allclose(np.asarray(fill_feats), ref_feats, atol=1e-6)
    assert np.allclose(np.asarray(adj), ref_adj, atol=1e-6)
    print("KERNEL_OK")
</pallas_src>

<mosaic_0001>
module attributes {stable_mosaic.version = 11 : i64} {
  func.func @_feat_kernel(%arg0: i32, %arg1: memref<2x128xf32, #tpu.memory_space<vmem>>, %arg2: memref<2x512xf32, #tpu.memory_space<vmem>>, %arg3: memref<2x640xf32, #tpu.memory_space<vmem>>) attributes {dimension_semantics = [#tpu.dimension_semantics<parallel>], iteration_bounds = array<i64: 1>, scalar_prefetch = 0 : i64, scratch_operands = 0 : i64, tpu.core_type = #tpu.core_type<tc>, window_params = [{transform_indices = @transform_0, window_bounds = array<i64: 2, 128>}, {transform_indices = @transform_1, window_bounds = array<i64: 2, 512>}, {transform_indices = @transform_2, window_bounds = array<i64: 2, 640>}]} {
    %c0 = arith.constant 0 : index
    %c0_0 = arith.constant 0 : index
    %0 = vector.load %arg1[%c0, %c0_0] : memref<2x128xf32, #tpu.memory_space<vmem>>, vector<2x128xf32>
    %c0_1 = arith.constant 0 : index
    %c0_2 = arith.constant 0 : index
    %1 = vector.load %arg3[%c0_1, %c0_2] : memref<2x640xf32, #tpu.memory_space<vmem>>, vector<2x128xf32>
    tpu.vector_store %arg3[%c0_1, %c0_2], %0 {strides = array<i32>} : memref<2x640xf32, #tpu.memory_space<vmem>>, vector<2x128xf32>,
    %c0_3 = arith.constant 0 : index
    %c0_4 = arith.constant 0 : index
    %2 = vector.load %arg2[%c0_3, %c0_4] : memref<2x512xf32, #tpu.memory_space<vmem>>, vector<2x512xf32>
    %c0_5 = arith.constant 0 : index
    %c128 = arith.constant 128 : index
    %3 = vector.load %arg3[%c0_5, %c128] : memref<2x640xf32, #tpu.memory_space<vmem>>, vector<2x512xf32>
    tpu.vector_store %arg3[%c0_5, %c128], %2 {strides = array<i32>} : memref<2x640xf32, #tpu.memory_space<vmem>>, vector<2x512xf32>,
    return
  }
  func.func @transform_0(%arg0: i32) -> (i32, i32) {
    %c0_i32 = arith.constant 0 : i32
    %c0_i32_0 = arith.constant 0 : i32
    return %arg0, %c0_i32 : i32, i32
  }
  func.func @transform_1(%arg0: i32) -> (i32, i32) {
    %c0_i32 = arith.constant 0 : i32
    %c0_i32_0 = arith.constant 0 : i32
    return %arg0, %c0_i32 : i32, i32
  }
  func.func @transform_2(%arg0: i32) -> (i32, i32) {
    %c0_i32 = arith.constant 0 : i32
    %c0_i32_0 = arith.constant 0 : i32
    return %arg0, %c0_i32 : i32, i32
  }
}

</mosaic_0001>

<llo_original>
// kernel: tpu_custom_call.1
$region0: #{tpu_custom_call.1}
  #allocation0 [shape = 'u32[]', space=smem, size = 0x4, offset = 0x4, fixed_abs, tag = 'smem constant byte address 0x4 - core index']
  #allocation1 [shape = 'u32[144,128]{1,0:T(1,128)}', space=vmem, size = 0x12000, scoped, tag = 'internal scratch']
  %s0 = inlined_call_operand.hbm [shape: f32[2,128], index: 0, kind: input, shape index: {}]
  %s1 = inlined_call_operand.hbm [shape: f32[2,512], index: 1, kind: input, shape index: {}]
  %s2 = inlined_call_operand.hbm [shape: f32[2,640], index: 2, kind: output, shape index: {}]
  %s3 = sld [smem:[#allocation0]]
  $region26: #{tpu_custom_call.1} parent=0
    _
  %s5 = ssub.s32 1, %s3
  %s6 = scalar_select 0, %s5, %s3
  $region1: #{tpu_custom_call.1} parent=0
    #allocation2 [shape = 'u8[1024]{0}', space=vmem, size = 0x400, scoped, tag = 'input window, operand 0, single buffered']
    #allocation3 [shape = 's32[1]{0}', space=sflag, size = 0x4, scoped, tag = 'scoped memory for tpu_custom_call.1']
    #allocation4 [shape = 's32[1]{0}', space=sflag, size = 0x4, scoped, tag = 'scoped memory for tpu_custom_call.1']
    #allocation5 [shape = 'u8[4096]{0}', space=vmem, size = 0x1000, scoped, tag = 'input window, operand 1, single buffered']
    #allocation6 [shape = 's32[1]{0}', space=sflag, size = 0x4, scoped, tag = 'scoped memory for tpu_custom_call.1']
    #allocation7 [shape = 'u8[5120]{0}', space=vmem, size = 0x1400, scoped, tag = 'output window, operand 0, single buffered']
    %7 = vsyncpa [#allocation3], 0
    %8 = vsyncpa [#allocation6], 0
    %9 = vsyncpa [#allocation4], 0
    // Predicated region
    $region2: #{tpu_custom_call.1} parent=1 // pred_check
      _
    $region3: #{tpu_custom_call.1} parent=1 // pred_check_branch
      %11 = sbr.rel (0) target = $region5
    $region4: #{tpu_custom_call.1} parent=1 // pred_region
      %s13 = ssub.s32 32, 32
      %14 = vsyncadd [#allocation3], %s13
      %s16 = sshll.u32 [#allocation2], 4
      %s17 = int_to_ptr.vmem [resolvable:$true] %s16
      %19 = dma.hbm_to_vmem [thread:$0]  %s0, 32, %s17, [#allocation3]
    $region5: #{tpu_custom_call.1} parent=1 // pred_fallthru
      _
    // Predicated region
    $region6: #{tpu_custom_call.1} parent=1 // pred_check
      _
    $region7: #{tpu_custom_call.1} parent=1 // pred_check_branch
      %21 = sbr.rel (0) target = $region9
    $region8: #{tpu_custom_call.1} parent=1 // pred_region
      %s23 = ssub.s32 128, 128
      %24 = vsyncadd [#allocation6], %s23
      %s26 = sshll.u32 [#allocation5], 4
      %s27 = int_to_ptr.vmem [resolvable:$true] %s26
      %29 = dma.hbm_to_vmem [thread:$0]  %s1, 128, %s27, [#allocation6]
    $region9: #{tpu_custom_call.1} parent=1 // pred_fallthru
      _
    // Predicated region
    $region10: #{tpu_custom_call.1} parent=1 // pred_check
      _
    $region11: #{tpu_custom_call.1} parent=1 // pred_check_branch
      %31 = sbr.rel (0) target = $region13
    $region12: #{tpu_custom_call.1} parent=1 // pred_region
      %32 = dma.done [#allocation3], 32
    $region13: #{tpu_custom_call.1} parent=1 // pred_fallthru
      _
    // Predicated region
    $region14: #{tpu_custom_call.1} parent=1 // pred_check
      _
    $region15: #{tpu_custom_call.1} parent=1 // pred_check_branch
      %34 = sbr.rel (0) target = $region17
    $region16: #{tpu_custom_call.1} parent=1 // pred_region
      %35 = dma.done [#allocation6], 128
    $region17: #{tpu_custom_call.1} parent=1 // pred_fallthru
      _
    %v36 = vld [vmem:[#allocation2] sm:$0x3]
    %37 = vst [vmem:[#allocation7] sm:$0x3] %v36
    %v38 = vld [vmem:[#allocation5] sm:$0xff]
    %39 = vst [vmem:[#allocation7 + $0x2] sm:$0xff] %v38
    // Predicated region
    $region18: #{tpu_custom_call.1} parent=1 // pred_check
      _
    $region19: #{tpu_custom_call.1} parent=1 // pred_check_branch
      %41 = sbr.rel (0) target = $region21
    $region20: #{tpu_custom_call.1} parent=1 // pred_region
      %s43 = ssub.s32 160, 160
      %44 = vsyncadd [#allocation4], %s43
      %s46 = sshll.u32 [#allocation7], 4
      %s47 = int_to_ptr.vmem [resolvable:$true] %s46
      %49 = dma.vmem_to_hbm [thread:$0]  %s47, 160, %s2, [#allocation4]
    $region21: #{tpu_custom_call.1} parent=1 // pred_fallthru
      _
    // Predicated region
    $region22: #{tpu_custom_call.1} parent=1 // pred_check
      _
    $region23: #{tpu_custom_call.1} parent=1 // pred_check_branch
      %51 = sbr.rel (0) target = $region25
    $region24: #{tpu_custom_call.1} parent=1 // pred_region
      %52 = dma.done [#allocation4], 160
    $region25: #{tpu_custom_call.1} parent=1 // pred_fallthru
      _
    %53 = vsyncpa [#allocation3], 1
    %54 = vsyncpa [#allocation6], 1
    %55 = vsyncpa [#allocation4], 1

</llo_original>
